<compile_context>
chip_gen: v7x
topology: tpu7x:2x2x1
jax: 0.10.0
libtpu: 0.0.40
codegen_flags: <defaults>
</compile_context>

<pallas_src>
import functools

import jax
import jax.numpy as jnp
from jax.experimental import pallas as pl
from jax.experimental.pallas import tpu as pltpu


def _round_up(x, m):
    return ((x + m - 1) // m) * m


def _row_dropout_kernel(seed_ref, x_ref, o_ref, *, p, tm):
    """One grid step handles a (TM, TD) tile of x.

    Builds a per-row keep mask from a stateless hash of (seed, absolute row index),
    thresholds it in the integer domain, and applies the scaled mask to the tile.
    """
    i = pl.program_id(0)  # row-tile index

    # Absolute row index for every row of this tile (2-D iota, TPU-friendly).
    row = jax.lax.broadcasted_iota(jnp.int32, (tm, 1), 0) + i * tm

    # --- stateless counter-based hash: mix(seed) xor row, then avalanche ---
    s = seed_ref[0].astype(jnp.uint32)
    s = (s ^ (s >> jnp.uint32(16))) * jnp.uint32(0x045D9F3B)
    s = (s ^ (s >> jnp.uint32(16))) * jnp.uint32(0x045D9F3B)
    s = s ^ (s >> jnp.uint32(16))

    h = row.astype(jnp.uint32) ^ s
    h = (h ^ (h >> jnp.uint32(16))) * jnp.uint32(0x7FEB352D)
    h = (h ^ (h >> jnp.uint32(15))) * jnp.uint32(0x846CA68B)
    h = h ^ (h >> jnp.uint32(16))

    # Integer-domain threshold on 24 random bits: P(drop) = p.
    u24 = (h & jnp.uint32(0x00FFFFFF)).astype(jnp.int32)           # (tm, 1)
    thresh = jnp.int32(int(round(p * (1 << 24))))
    keep_scale = jnp.float32(1.0 / (1.0 - p))
    mask = jnp.where(u24 >= thresh, keep_scale, jnp.float32(0.0))  # (tm, 1) f32

    x = x_ref[...]
    o_ref[...] = (x * mask.astype(x.dtype)).astype(o_ref.dtype)


def _choose_tiles(N, D, itemsize):
    """Pick (TM, TD) satisfying the (8, 128) rule with ~4 MiB blocks.

    ~4 MiB per block * (in + out) * double buffering = ~16 MiB of VMEM; we raise
    the scoped-VMEM limit to 32 MiB explicitly so this also fits on v5e (default
    16 MiB) while staying well inside v6e (128 MiB) and v7x (64 MiB) physical VMEM.
    """
    target_block_bytes = 4 * 1024 * 1024
    # Feature tile: a multiple of 128 (lane-dense, unmasked stores) when possible,
    # otherwise the full feature dim (allowed by the block-shape rule).
    if D % 128 == 0:
        TD = min(D, 2048)
    else:
        TD = D
    # Row tile: multiple of 8, sized to the byte target, capped at 4096 rows.
    TM = target_block_bytes // max(1, TD * itemsize)
    TM = max(8, min(4096, (TM // 8) * 8))
    TM = min(TM, _round_up(N, 8))
    return TM, TD


def dropout_if_training(x, *, p=0.0, training=True, seed=0, submodule=None):
    """JAX/Pallas equivalent of DropoutIfTraining(p, submodule).forward(x).

    x: (N, D) array. Rows are kept (scaled by 1/(1-p)) or zeroed, as in
    F.dropout(ones((N, 1)), p) broadcast-multiplied into x.
    """
    assert 0.0 <= p <= 1.0
    # submodule defaults to nn.Identity(); an arbitrary user submodule is applied
    # as plain JAX ahead of the kernel (it cannot be fused generically).
    # TODO(synk): fuse simple submodules (e.g. MLP) into the Pallas kernel.
    if submodule is not None:
        x = submodule(x)
    if (not training) or p == 0.0:
        return x
    if p >= 1.0:
        # PyTorch dropout with p=1 zeroes everything.
        return jnp.zeros_like(x)

    N, D = x.shape
    TM, TD = _choose_tiles(N, D, jnp.dtype(x.dtype).itemsize)
    grid = (pl.cdiv(N, TM), pl.cdiv(D, TD))
    seed_arr = jnp.array([seed], dtype=jnp.int32)

    kernel = functools.partial(_row_dropout_kernel, p=float(p), tm=TM)

    return pl.pallas_call(
        kernel,
        out_shape=jax.ShapeDtypeStruct((N, D), x.dtype),
        grid_spec=pltpu.PrefetchScalarGridSpec(
            num_scalar_prefetch=1,
            grid=grid,
            in_specs=[pl.BlockSpec((TM, TD), lambda i, j, seed: (i, j))],
            out_specs=pl.BlockSpec((TM, TD), lambda i, j, seed: (i, j)),
        ),
        compiler_params=pltpu.CompilerParams(
            # Stateless per-tile mask -> fully independent grid steps; lets v7x
            # shard the grid across both TensorCores. No-op on v5e/v6e.
            dimension_semantics=("parallel", "parallel"),
            # Headroom for 4 MiB double-buffered in/out blocks (v5e default is 16 MiB).
            vmem_limit_bytes=32 * 1024 * 1024,
        ),
    )(seed_arr, x)


if __name__ == "__main__":
    key = jax.random.PRNGKey(0)
    N, D = 16, 32  # small demo shapes: 16 rows (nodes), hidden=32
    x = jax.random.normal(key, (N, D), dtype=jnp.float32)

    p = 0.3

    # Training path: row-wise dropout mask applied inside the Pallas kernel.
    out_train = jax.block_until_ready(
        dropout_if_training(x, p=p, training=True, seed=1234)
    )

    # Eval path: identity (dropout is a no-op).
    out_eval = jax.block_until_ready(
        dropout_if_training(x, p=p, training=False)
    )

    # Sanity checks of the semantics.
    assert out_train.shape == x.shape and out_train.dtype == x.dtype
    assert bool(jnp.all(out_eval == x))

    # Each row must be either exactly zero or x_row / (1 - p).
    scale = 1.0 / (1.0 - p)
    row_zero = jnp.all(out_train == 0.0, axis=1)
    row_scaled = jnp.all(jnp.abs(out_train - x * scale) < 1e-5, axis=1)
    assert bool(jnp.all(row_zero | row_scaled))

    print("KERNEL_OK")
</pallas_src>

<mosaic_0001>
module attributes {stable_mosaic.version = 11 : i64} {
  func.func @_row_dropout_kernel(%arg0: i32, %arg1: i32, %arg2: memref<1xi32, #tpu.memory_space<smem>>, %arg3: memref<16x32xf32, #tpu.memory_space<vmem>>, %arg4: memref<16x32xf32, #tpu.memory_space<vmem>>) attributes {dimension_semantics = [#tpu.dimension_semantics<parallel>, #tpu.dimension_semantics<parallel>], iteration_bounds = array<i64: 1, 1>, scalar_prefetch = 1 : i64, scratch_operands = 0 : i64, tpu.core_type = #tpu.core_type<tc>, window_params = [{transform_indices = @transform_0, window_bounds = array<i64: 16, 32>}, {transform_indices = @transform_1, window_bounds = array<i64: 16, 32>}]} {
    %0 = tpu.iota {dimensions = array<i32: 0>} : vector<16x1xi32>
    %c16_i32 = arith.constant 16 : i32
    %1 = arith.muli %arg0, %c16_i32 : i32
    %2 = vector.broadcast %1 : i32 to vector<16x1xi32>
    %3 = arith.addi %0, %2 : vector<16x1xi32>
    %c0 = arith.constant 0 : index
    %4 = memref.load %arg2[%c0] : memref<1xi32, #tpu.memory_space<smem>>
    %c16_i32_0 = arith.constant 16 : i32
    %5 = arith.shrui %4, %c16_i32_0 : i32
    %6 = arith.xori %4, %5 : i32
    %c73244475_i32 = arith.constant 73244475 : i32
    %7 = arith.muli %6, %c73244475_i32 : i32
    %c16_i32_1 = arith.constant 16 : i32
    %8 = arith.shrui %7, %c16_i32_1 : i32
    %9 = arith.xori %7, %8 : i32
    %c73244475_i32_2 = arith.constant 73244475 : i32
    %10 = arith.muli %9, %c73244475_i32_2 : i32
    %c16_i32_3 = arith.constant 16 : i32
    %11 = arith.shrui %10, %c16_i32_3 : i32
    %12 = arith.xori %10, %11 : i32
    %13 = vector.broadcast %12 : i32 to vector<16x1xi32>
    %14 = arith.xori %3, %13 : vector<16x1xi32>
    %c16_i32_4 = arith.constant 16 : i32
    %15 = vector.broadcast %c16_i32_4 : i32 to vector<16x1xi32>
    %16 = arith.shrui %14, %15 : vector<16x1xi32>
    %17 = arith.xori %14, %16 : vector<16x1xi32>
    %c2146121005_i32 = arith.constant 2146121005 : i32
    %18 = vector.broadcast %c2146121005_i32 : i32 to vector<16x1xi32>
    %19 = arith.muli %17, %18 : vector<16x1xi32>
    %c15_i32 = arith.constant 15 : i32
    %20 = vector.broadcast %c15_i32 : i32 to vector<16x1xi32>
    %21 = arith.shrui %19, %20 : vector<16x1xi32>
    %22 = arith.xori %19, %21 : vector<16x1xi32>
    %c-2073254261_i32 = arith.constant -2073254261 : i32
    %23 = vector.broadcast %c-2073254261_i32 : i32 to vector<16x1xi32>
    %24 = arith.muli %22, %23 : vector<16x1xi32>
    %c16_i32_5 = arith.constant 16 : i32
    %25 = vector.broadcast %c16_i32_5 : i32 to vector<16x1xi32>
    %26 = arith.shrui %24, %25 : vector<16x1xi32>
    %27 = arith.xori %24, %26 : vector<16x1xi32>
    %c16777215_i32 = arith.constant 16777215 : i32
    %28 = vector.broadcast %c16777215_i32 : i32 to vector<16x1xi32>
    %29 = arith.andi %27, %28 : vector<16x1xi32>
    %c5033165_i32 = arith.constant 5033165 : i32
    %30 = vector.broadcast %c5033165_i32 : i32 to vector<16x1xi32>
    %31 = arith.cmpi sge, %29, %30 : vector<16x1xi32>
    %cst = arith.constant 1.42857146 : f32
    %cst_6 = arith.constant 0.000000e+00 : f32
    %32 = vector.broadcast %cst : f32 to vector<16x1xf32>
    %33 = vector.broadcast %cst_6 : f32 to vector<16x1xf32>
    %34 = arith.select %31, %32, %33 : vector<16x1xi1>, vector<16x1xf32>
    %c0_7 = arith.constant 0 : index
    %c0_8 = arith.constant 0 : index
    %35 = vector.load %arg3[%c0_7, %c0_8] : memref<16x32xf32, #tpu.memory_space<vmem>>, vector<16x32xf32>
    %36 = vector.broadcast %34 : vector<16x1xf32> to vector<16x32xf32>
    %37 = arith.mulf %35, %36 : vector<16x32xf32>
    %c0_9 = arith.constant 0 : index
    %c0_10 = arith.constant 0 : index
    %38 = vector.load %arg4[%c0_9, %c0_10] : memref<16x32xf32, #tpu.memory_space<vmem>>, vector<16x32xf32>
    tpu.vector_store %arg4[%c0_9, %c0_10], %37 {strides = array<i32>} : memref<16x32xf32, #tpu.memory_space<vmem>>, vector<16x32xf32>,
    return
  }
  func.func @transform_0(%arg0: i32, %arg1: i32, %arg2: memref<1xi32, #tpu.memory_space<smem>>) -> (i32, i32) {
    %c0_i32 = arith.constant 0 : i32
    return %arg0, %arg1 : i32, i32
  }
  func.func @transform_1(%arg0: i32, %arg1: i32, %arg2: memref<1xi32, #tpu.memory_space<smem>>) -> (i32, i32) {
    %c0_i32 = arith.constant 0 : i32
    return %arg0, %arg1 : i32, i32
  }
}

</mosaic_0001>

<llo_original>
// kernel: tpu_custom_call.1
$region0: #{tpu_custom_call.1}
  #allocation0 [shape = 'u32[]', space=smem, size = 0x4, offset = 0x4, fixed_abs, tag = 'smem constant byte address 0x4 - core index']
  #allocation1 [shape = 'u32[144,128]{1,0:T(1,128)}', space=vmem, size = 0x12000, scoped, tag = 'internal scratch']
  #allocation2 [shape = 's32[1]{0}', space=sflag, size = 0x4, scoped, tag = 'scoped memory for tpu_custom_call.1']
  #allocation3 [shape = 's32[1]{0:T(128)S(6)}', space=smem, size = 0x200, scoped, tag = 'prefetched SMEM operand 0']
  %s0 = inlined_call_operand.<no memory space> [shape: s32[1], index: 0, kind: input, shape index: {}]
  %s1 = inlined_call_operand.hbm [shape: f32[16,32], index: 1, kind: input, shape index: {}]
  %s2 = inlined_call_operand.hbm [shape: f32[16,32], index: 2, kind: output, shape index: {}]
  %s3 = sld [smem:[#allocation0]]
  $region18: #{tpu_custom_call.1} parent=0
    _
  %s5 = ssub.s32 1, %s3
  %s6 = scalar_select 0, %s5, %s3
  %7 = sst [smem:[#allocation3]] %s0
  $region1: #{tpu_custom_call.1} parent=0
    #allocation4 [shape = 'u8[8192]{0}', space=vmem, size = 0x2000, scoped, tag = 'input window, operand 1, single buffered']
    #allocation5 [shape = 's32[1]{0}', space=sflag, size = 0x4, scoped, tag = 'scoped memory for tpu_custom_call.1']
    #allocation6 [shape = 's32[1]{0}', space=sflag, size = 0x4, scoped, tag = 'scoped memory for tpu_custom_call.1']
    #allocation7 [shape = 'u8[8192]{0}', space=vmem, size = 0x2000, scoped, tag = 'output window, operand 0, single buffered']
    %8 = vsyncpa [#allocation5], 0
    %9 = vsyncpa [#allocation6], 0
    // Predicated region
    $region2: #{tpu_custom_call.1} parent=1 // pred_check
      _
    $region3: #{tpu_custom_call.1} parent=1 // pred_check_branch
      %11 = sbr.rel (0) target = $region5
    $region4: #{tpu_custom_call.1} parent=1 // pred_region
      %s13 = ssub.s32 256, 256
      %14 = vsyncadd [#allocation5], %s13
      %s15 = sshll.u32 [#allocation4], 4
      %s16 = int_to_ptr.vmem [resolvable:$true] %s15
      %21 = dma.hbm_to_vmem [thread:$0]  %s1, 256, %s16, [#allocation5], 128, 128, 8
    $region5: #{tpu_custom_call.1} parent=1 // pred_fallthru
      _
    // Predicated region
    $region6: #{tpu_custom_call.1} parent=1 // pred_check
      _
    $region7: #{tpu_custom_call.1} parent=1 // pred_check_branch
      %23 = sbr.rel (0) target = $region9
    $region8: #{tpu_custom_call.1} parent=1 // pred_region
      %24 = dma.done [#allocation5], 256
    $region9: #{tpu_custom_call.1} parent=1 // pred_fallthru
      _
    %v25 = vlaneseq
    %v26 = vshrl.u32 %v25, 7
    %v27 = vadd.s32 %v26, 8
    %s28 = smul.u32 0, 16
    %v29 = vstv %s28
    %v30 = vadd.s32 %v26, %v29
    %v31 = vadd.s32 %v27, %v29
    %s32 = sld [smem:[#allocation3]]
    %s33 = sshrl.u32 %s32, 16
    %s34 = sxor.u32 %s32, %s33
    %s35 = smul.u32 %s34, 73244475
    %s36 = sshrl.u32 %s35, 16
    %s37 = sxor.u32 %s35, %s36
    %s38 = smul.u32 %s37, 73244475
    %s39 = sshrl.u32 %s38, 16
    %s40 = sxor.u32 %s38, %s39
    %v41 = vstv %s40
    %v42 = vxor.u32 %v30, %v41
    %v43 = vxor.u32 %v31, %v41
    %v44 = vshrl.u32 %v42, 16
    %v45 = vshrl.u32 %v43, 16
    %v46 = vxor.u32 %v42, %v44
    %v47 = vxor.u32 %v43, %v45
    %v48 = vmul.u32 %v46, 2146121005
    %v49 = vmul.u32 %v47, 2146121005
    %v50 = vshrl.u32 %v48, 15
    %v51 = vshrl.u32 %v49, 15
    %v52 = vxor.u32 %v48, %v50
    %v53 = vxor.u32 %v49, %v51
    %v54 = vmul.u32 %v52, 2221713035
    %v55 = vmul.u32 %v53, 2221713035
    %v56 = vshrl.u32 %v54, 16
    %v57 = vshrl.u32 %v55, 16
    %v58 = vxor.u32 %v54, %v56
    %v59 = vxor.u32 %v55, %v57
    %v60 = vand.u32 %v58, 16777215
    %v61 = vand.u32 %v59, 16777215
    %vm62 = vcmp.ge.s32.totalorder %v60, 5033165
    %vm63 = vcmp.ge.s32.totalorder %v61, 5033165
    %v64 = vsel %vm62, 1.4285715, 0.0
    %v65 = vsel %vm63, 1.4285715, 0.0
    %v66 = vld [vmem:[#allocation4] sm:$0xff]
    %v67 = vld [vmem:[#allocation4 + $0x8] sm:$0xff]
    %v68 = vmul.f32 %v66, %v64
    %v69 = vmul.f32 %v67, %v65
    %vm70 = vcmask 261120
    %71 = vst.msk [vmem:[#allocation7] sm:$0xff] %vm70, %v68
    %72 = vst.msk [vmem:[#allocation7 + $0x8] sm:$0xff] %vm70, %v69
    // Predicated region
    $region10: #{tpu_custom_call.1} parent=1 // pred_check
      _
    $region11: #{tpu_custom_call.1} parent=1 // pred_check_branch
      %74 = sbr.rel (0) target = $region13
    $region12: #{tpu_custom_call.1} parent=1 // pred_region
      %s76 = ssub.s32 256, 256
      %77 = vsyncadd [#allocation6], %s76
      %s78 = sshll.u32 [#allocation7], 4
      %s79 = int_to_ptr.vmem [resolvable:$true] %s78
      %84 = dma.vmem_to_hbm [thread:$0]  %s79, 256, %s2, [#allocation6], 128, 128, 8
    $region13: #{tpu_custom_call.1} parent=1 // pred_fallthru
      _
    // Predicated region
    $region14: #{tpu_custom_call.1} parent=1 // pred_check
      _
    $region15: #{tpu_custom_call.1} parent=1 // pred_check_branch
      %86 = sbr.rel (0) target = $region17
    $region16: #{tpu_custom_call.1} parent=1 // pred_region
      %87 = dma.done [#allocation6], 256
    $region17: #{tpu_custom_call.1} parent=1 // pred_fallthru
      _
    %88 = vsyncpa [#allocation5], 1
    %89 = vsyncpa [#allocation6], 1

</llo_original>
